<compile_context>
chip_gen: v5e
topology: v5e:2x2
jax: 0.10.0
libtpu: 0.0.40
codegen_flags: <defaults>
</compile_context>

<pallas_src>
import jax
import jax.numpy as jnp
from jax.experimental import pallas as pl
from jax.experimental.pallas import tpu as pltpu

KERNEL_SIZE = 8
STRIDE = 8
PADDING = KERNEL_SIZE // 2  # int(kernel_size / 2) == 4


# ----------------------------- kernels ---------------------------------------

def _pool_kernel_flat(x_ref, o_ref):
    """Primary path. x_ref: (tbc, 8*tl) lane-contiguous windows; o_ref: (tbc, tl)."""
    tl = o_ref.shape[-1]
    acc = x_ref[:, pl.ds(0, tl, stride=KERNEL_SIZE)].astype(jnp.float32)
    for k in range(1, KERNEL_SIZE):
        acc = acc + x_ref[:, pl.ds(k, tl, stride=KERNEL_SIZE)].astype(jnp.float32)
    o_ref[...] = (acc * (1.0 / KERNEL_SIZE)).astype(o_ref.dtype)


def _pool_kernel_kfirst(x_ref, o_ref):
    """Fallback path. x_ref: (8, tbc, tl) window-tap-major; o_ref: (tbc, tl)."""
    acc = x_ref[0].astype(jnp.float32)
    for k in range(1, KERNEL_SIZE):
        acc = acc + x_ref[k].astype(jnp.float32)
    o_ref[...] = (acc * (1.0 / KERNEL_SIZE)).astype(o_ref.dtype)


# ------------------- one-time probe for lane-strided slices -------------------

_STRIDED_OK = None


def _strided_lane_slices_supported():
    """Check (once) that stride-8 lane slices on a VMEM ref lower and compute correctly."""
    global _STRIDED_OK
    if _STRIDED_OK is None:
        try:
            n = 128
            row = jnp.arange(KERNEL_SIZE * n, dtype=jnp.float32)
            probe = jnp.tile(row[None, :], (8, 1))  # (8, 1024)
            out = pl.pallas_call(
                _pool_kernel_flat,
                out_shape=jax.ShapeDtypeStruct((8, n), jnp.float32),
                grid=(1, 1),
                in_specs=[pl.BlockSpec((8, KERNEL_SIZE * n), lambda i, j: (i, j))],
                out_specs=pl.BlockSpec((8, n), lambda i, j: (i, j)),
            )(probe)
            out = jax.block_until_ready(out)
            want = jnp.mean(probe.reshape(8, n, KERNEL_SIZE), axis=-1)
            _STRIDED_OK = bool(jnp.allclose(out, want, atol=1e-5, rtol=1e-5))
        except Exception:
            _STRIDED_OK = False
    return _STRIDED_OK


# ----------------------------- wrapper ----------------------------------------

def _pick_row_tile(bc, max_rows=256):
    # Second-minor block dim must be a multiple of 8 or equal the full dim.
    if bc < 8:
        return bc
    return min(max_rows, (bc // 8) * 8)


def _pick_lane_tile(lout, max_lanes=512):
    # Lane-dense output: multiple of 128 when possible, else the full (small) dim.
    if lout < 128:
        return lout
    return min(max_lanes, (lout // 128) * 128)


def frame_avg_pool(x, *, block_rows=256, block_lanes=512):
    """x: (B, C, T) -> (B, C, Lout) with Lout = floor((T + 2*4 - 8)/8) + 1."""
    B, C, T = x.shape
    Lout = (T + 2 * PADDING - KERNEL_SIZE) // STRIDE + 1
    BC = B * C

    # Zero-pad (count_include_pad=True) and crop to exactly Lout*8 samples.
    xp = jnp.pad(x, ((0, 0), (0, 0), (PADDING, PADDING)))[:, :, : Lout * KERNEL_SIZE]

    tbc = _pick_row_tile(BC, block_rows)
    tl = _pick_lane_tile(Lout, block_lanes)
    grid = (pl.cdiv(BC, tbc), pl.cdiv(Lout, tl))

    cparams = pltpu.CompilerParams(dimension_semantics=("parallel", "parallel"))
    out_shape = jax.ShapeDtypeStruct((BC, Lout), x.dtype)
    out_spec = pl.BlockSpec((tbc, tl), lambda i, j: (i, j))

    if _strided_lane_slices_supported():
        # No transpose copy: free reshape to (BC, Lout*8); de-interleave in-kernel.
        flat = xp.reshape(BC, Lout * KERNEL_SIZE)
        out2d = pl.pallas_call(
            _pool_kernel_flat,
            out_shape=out_shape,
            grid=grid,
            in_specs=[pl.BlockSpec((tbc, KERNEL_SIZE * tl), lambda i, j: (i, j))],
            out_specs=out_spec,
            compiler_params=cparams,
        )(flat)
    else:
        # Fallback: one XLA pad+transpose pass to (8, BC, Lout); kernel adds 8 slabs.
        xw = jnp.transpose(xp.reshape(BC, Lout, KERNEL_SIZE), (2, 0, 1))
        out2d = pl.pallas_call(
            _pool_kernel_kfirst,
            out_shape=out_shape,
            grid=grid,
            in_specs=[pl.BlockSpec((KERNEL_SIZE, tbc, tl), lambda i, j: (0, i, j))],
            out_specs=out_spec,
            compiler_params=cparams,
        )(xw)

    return out2d.reshape(B, C, Lout)


# ----------------------------- reference --------------------------------------

def _reference_avg_pool(x):
    """Plain-JAX reference of torch.nn.AvgPool1d(8, 8, 4) (count_include_pad=True)."""
    B, C, T = x.shape
    Lout = (T + 2 * PADDING - KERNEL_SIZE) // STRIDE + 1
    xp = jnp.pad(x, ((0, 0), (0, 0), (PADDING, PADDING)))
    cols = []
    for i in range(Lout):
        s = i * STRIDE
        cols.append(jnp.mean(xp[:, :, s:s + KERNEL_SIZE], axis=-1))
    return jnp.stack(cols, axis=-1)


if __name__ == "__main__":
    # Small shape consistent with the module's forward (B, C, T).
    B, C, T = 2, 4, 16
    x = jax.random.normal(jax.random.PRNGKey(0), (B, C, T), dtype=jnp.float32)

    out = jax.block_until_ready(frame_avg_pool(x))
    ref = _reference_avg_pool(x)
    assert out.shape == (B, C, (T + 2 * PADDING - KERNEL_SIZE) // STRIDE + 1), out.shape
    assert jnp.allclose(out, ref, atol=1e-5, rtol=1e-5), "mismatch vs reference (small)"

    # Second shape exercises the real tiled grid + masked edge tiles (BC=16, Lout=129).
    B2, C2, T2 = 2, 8, 1024
    x2 = jax.random.normal(jax.random.PRNGKey(1), (B2, C2, T2), dtype=jnp.float32)
    out2 = jax.block_until_ready(frame_avg_pool(x2))
    ref2 = _reference_avg_pool(x2)
    assert out2.shape == (B2, C2, (T2 + 2 * PADDING - KERNEL_SIZE) // STRIDE + 1), out2.shape
    assert jnp.allclose(out2, ref2, atol=1e-5, rtol=1e-5), "mismatch vs reference (tiled)"

    print("KERNEL_OK")
</pallas_src>

<mosaic_0001>
module attributes {stable_mosaic.version = 11 : i64} {
  func.func @_pool_kernel_flat(%arg0: i32, %arg1: i32, %arg2: memref<8x1024xf32, #tpu.memory_space<vmem>>, %arg3: memref<8x128xf32, #tpu.memory_space<vmem>>) attributes {dimension_semantics = [#tpu.dimension_semantics<arbitrary>, #tpu.dimension_semantics<arbitrary>], iteration_bounds = array<i64: 1, 1>, scalar_prefetch = 0 : i64, scratch_operands = 0 : i64, tpu.core_type = #tpu.core_type<tc>, window_params = [{transform_indices = @transform_0, window_bounds = array<i64: 8, 1024>}, {transform_indices = @transform_1, window_bounds = array<i64: 8, 128>}]} {
    %c0 = arith.constant 0 : index
    %c0_0 = arith.constant 0 : index
    %0 = tpu.strided_load %arg2[%c0, %c0_0] {strides = array<i32: 1, 8>} : memref<8x1024xf32, #tpu.memory_space<vmem>>, vector<8x128xf32>
    %c0_1 = arith.constant 0 : index
    %c1 = arith.constant 1 : index
    %1 = tpu.strided_load %arg2[%c0_1, %c1] {strides = array<i32: 1, 8>} : memref<8x1024xf32, #tpu.memory_space<vmem>>, vector<8x128xf32>
    %2 = arith.addf %0, %1 : vector<8x128xf32>
    %c0_2 = arith.constant 0 : index
    %c2 = arith.constant 2 : index
    %3 = tpu.strided_load %arg2[%c0_2, %c2] {strides = array<i32: 1, 8>} : memref<8x1024xf32, #tpu.memory_space<vmem>>, vector<8x128xf32>
    %4 = arith.addf %2, %3 : vector<8x128xf32>
    %c0_3 = arith.constant 0 : index
    %c3 = arith.constant 3 : index
    %5 = tpu.strided_load %arg2[%c0_3, %c3] {strides = array<i32: 1, 8>} : memref<8x1024xf32, #tpu.memory_space<vmem>>, vector<8x128xf32>
    %6 = arith.addf %4, %5 : vector<8x128xf32>
    %c0_4 = arith.constant 0 : index
    %c4 = arith.constant 4 : index
    %7 = tpu.strided_load %arg2[%c0_4, %c4] {strides = array<i32: 1, 8>} : memref<8x1024xf32, #tpu.memory_space<vmem>>, vector<8x128xf32>
    %8 = arith.addf %6, %7 : vector<8x128xf32>
    %c0_5 = arith.constant 0 : index
    %c5 = arith.constant 5 : index
    %9 = tpu.strided_load %arg2[%c0_5, %c5] {strides = array<i32: 1, 8>} : memref<8x1024xf32, #tpu.memory_space<vmem>>, vector<8x128xf32>
    %10 = arith.addf %8, %9 : vector<8x128xf32>
    %c0_6 = arith.constant 0 : index
    %c6 = arith.constant 6 : index
    %11 = tpu.strided_load %arg2[%c0_6, %c6] {strides = array<i32: 1, 8>} : memref<8x1024xf32, #tpu.memory_space<vmem>>, vector<8x128xf32>
    %12 = arith.addf %10, %11 : vector<8x128xf32>
    %c0_7 = arith.constant 0 : index
    %c7 = arith.constant 7 : index
    %13 = tpu.strided_load %arg2[%c0_7, %c7] {strides = array<i32: 1, 8>} : memref<8x1024xf32, #tpu.memory_space<vmem>>, vector<8x128xf32>
    %14 = arith.addf %12, %13 : vector<8x128xf32>
    %cst = arith.constant 1.250000e-01 : f32
    %15 = vector.broadcast %cst : f32 to vector<8x128xf32>
    %16 = arith.mulf %14, %15 : vector<8x128xf32>
    %c0_8 = arith.constant 0 : index
    %c0_9 = arith.constant 0 : index
    %17 = vector.load %arg3[%c0_8, %c0_9] : memref<8x128xf32, #tpu.memory_space<vmem>>, vector<8x128xf32>
    tpu.vector_store %arg3[%c0_8, %c0_9], %16 {strides = array<i32>} : memref<8x128xf32, #tpu.memory_space<vmem>>, vector<8x128xf32>,
    return
  }
  func.func @transform_0(%arg0: i32, %arg1: i32) -> (i32, i32) {
    %c0_i32 = arith.constant 0 : i32
    return %arg0, %arg1 : i32, i32
  }
  func.func @transform_1(%arg0: i32, %arg1: i32) -> (i32, i32) {
    %c0_i32 = arith.constant 0 : i32
    return %arg0, %arg1 : i32, i32
  }
}

module attributes {stable_mosaic.version = 11 : i64} {
  func.func @_pool_kernel_kfirst(%arg0: i32, %arg1: i32, %arg2: memref<8x8x3xf32, #tpu.memory_space<vmem>>, %arg3: memref<8x3xf32, #tpu.memory_space<vmem>>) attributes {dimension_semantics = [#tpu.dimension_semantics<parallel>, #tpu.dimension_semantics<parallel>], iteration_bounds = array<i64: 1, 1>, scalar_prefetch = 0 : i64, scratch_operands = 0 : i64, tpu.core_type = #tpu.core_type<tc>, window_params = [{transform_indices = @transform_0, window_bounds = array<i64: 8, 8, 3>}, {transform_indices = @transform_1, window_bounds = array<i64: 8, 3>}]} {
    %c0 = arith.constant 0 : index
    %c0_0 = arith.constant 0 : index
    %c0_1 = arith.constant 0 : index
    %0 = vector.load %arg2[%c0, %c0_0, %c0_1] : memref<8x8x3xf32, #tpu.memory_space<vmem>>, vector<1x8x3xf32>
    %1 = vector.shape_cast %0 : vector<1x8x3xf32> to vector<8x3xf32>
    %c1 = arith.constant 1 : index
    %c0_2 = arith.constant 0 : index
    %c0_3 = arith.constant 0 : index
    %2 = vector.load %arg2[%c1, %c0_2, %c0_3] : memref<8x8x3xf32, #tpu.memory_space<vmem>>, vector<1x8x3xf32>
    %3 = vector.shape_cast %2 : vector<1x8x3xf32> to vector<8x3xf32>
    %4 = arith.addf %1, %3 : vector<8x3xf32>
    %c2 = arith.constant 2 : index
    %c0_4 = arith.constant 0 : index
    %c0_5 = arith.constant 0 : index
    %5 = vector.load %arg2[%c2, %c0_4, %c0_5] : memref<8x8x3xf32, #tpu.memory_space<vmem>>, vector<1x8x3xf32>
    %6 = vector.shape_cast %5 : vector<1x8x3xf32> to vector<8x3xf32>
    %7 = arith.addf %4, %6 : vector<8x3xf32>
    %c3 = arith.constant 3 : index
    %c0_6 = arith.constant 0 : index
    %c0_7 = arith.constant 0 : index
    %8 = vector.load %arg2[%c3, %c0_6, %c0_7] : memref<8x8x3xf32, #tpu.memory_space<vmem>>, vector<1x8x3xf32>
    %9 = vector.shape_cast %8 : vector<1x8x3xf32> to vector<8x3xf32>
    %10 = arith.addf %7, %9 : vector<8x3xf32>
    %c4 = arith.constant 4 : index
    %c0_8 = arith.constant 0 : index
    %c0_9 = arith.constant 0 : index
    %11 = vector.load %arg2[%c4, %c0_8, %c0_9] : memref<8x8x3xf32, #tpu.memory_space<vmem>>, vector<1x8x3xf32>
    %12 = vector.shape_cast %11 : vector<1x8x3xf32> to vector<8x3xf32>
    %13 = arith.addf %10, %12 : vector<8x3xf32>
    %c5 = arith.constant 5 : index
    %c0_10 = arith.constant 0 : index
    %c0_11 = arith.constant 0 : index
    %14 = vector.load %arg2[%c5, %c0_10, %c0_11] : memref<8x8x3xf32, #tpu.memory_space<vmem>>, vector<1x8x3xf32>
    %15 = vector.shape_cast %14 : vector<1x8x3xf32> to vector<8x3xf32>
    %16 = arith.addf %13, %15 : vector<8x3xf32>
    %c6 = arith.constant 6 : index
    %c0_12 = arith.constant 0 : index
    %c0_13 = arith.constant 0 : index
    %17 = vector.load %arg2[%c6, %c0_12, %c0_13] : memref<8x8x3xf32, #tpu.memory_space<vmem>>, vector<1x8x3xf32>
    %18 = vector.shape_cast %17 : vector<1x8x3xf32> to vector<8x3xf32>
    %19 = arith.addf %16, %18 : vector<8x3xf32>
    %c7 = arith.constant 7 : index
    %c0_14 = arith.constant 0 : index
    %c0_15 = arith.constant 0 : index
    %20 = vector.load %arg2[%c7, %c0_14, %c0_15] : memref<8x8x3xf32, #tpu.memory_space<vmem>>, vector<1x8x3xf32>
    %21 = vector.shape_cast %20 : vector<1x8x3xf32> to vector<8x3xf32>
    %22 = arith.addf %19, %21 : vector<8x3xf32>
    %cst = arith.constant 1.250000e-01 : f32
    %23 = vector.broadcast %cst : f32 to vector<8x3xf32>
    %24 = arith.mulf %22, %23 : vector<8x3xf32>
    %c0_16 = arith.constant 0 : index
    %c0_17 = arith.constant 0 : index
    %25 = vector.load %arg3[%c0_16, %c0_17] : memref<8x3xf32, #tpu.memory_space<vmem>>, vector<8x3xf32>
    tpu.vector_store %arg3[%c0_16, %c0_17], %24 {strides = array<i32>} : memref<8x3xf32, #tpu.memory_space<vmem>>, vector<8x3xf32>,
    return
  }
  func.func @transform_0(%arg0: i32, %arg1: i32) -> (i32, i32, i32) {
    %c0_i32 = arith.constant 0 : i32
    %c0_i32_0 = arith.constant 0 : i32
    return %c0_i32, %arg0, %arg1 : i32, i32, i32
  }
  func.func @transform_1(%arg0: i32, %arg1: i32) -> (i32, i32) {
    %c0_i32 = arith.constant 0 : i32
    return %arg0, %arg1 : i32, i32
  }
}

</mosaic_0001>

<llo_original>
// kernel: tpu_custom_call.1
$region0: #{tpu_custom_call.1}
  #allocation0 [shape = 'u32[]', space=smem, size = 0x4, offset = 0x4, fixed_abs, tag = 'smem constant byte address 0x4 - core index']
  #allocation1 [shape = 'u32[72,128]{1,0:T(1,128)}', space=vmem, size = 0x9000, scoped, tag = 'internal scratch']
  %s0 = inlined_call_operand.vmem [shape: f32[8,8,3], index: 0, kind: input, shape index: {}]
  %s1 = inlined_call_operand.vmem [shape: f32[8,3], index: 1, kind: output, shape index: {}]
  %s2 = sld [smem:[#allocation0]]
  $region14: #{tpu_custom_call.1} parent=0
    _
  %s4 = ssub.s32 1, %s2
  %s5 = scalar_select 0, %s4, %s2
  // Predicated region
  $region2: #{tpu_custom_call.1} parent=0 // pred_check
    _
  $region3: #{tpu_custom_call.1} parent=0 // pred_check_branch
    %7 = sbr.rel (0) target = $region5
  $region4: #{tpu_custom_call.1} parent=0 // pred_region
    _
  $region5: #{tpu_custom_call.1} parent=0 // pred_fallthru
    _
  %v8 = vld [vmem:[%s0] sm:$0xff]
  %s9 = scalar_lea.vmem %s0, 8
  %v10 = vld [vmem:[%s9] sm:$0xff]
  %v11 = vadd.f32 %v8, %v10
  %s12 = scalar_lea.vmem %s0, 16
  %v13 = vld [vmem:[%s12] sm:$0xff]
  %v14 = vadd.f32 %v11, %v13
  %s15 = scalar_lea.vmem %s0, 24
  %v16 = vld [vmem:[%s15] sm:$0xff]
  %v17 = vadd.f32 %v14, %v16
  %s18 = scalar_lea.vmem %s0, 32
  %v19 = vld [vmem:[%s18] sm:$0xff]
  %v20 = vadd.f32 %v17, %v19
  %s21 = scalar_lea.vmem %s0, 40
  %v22 = vld [vmem:[%s21] sm:$0xff]
  %v23 = vadd.f32 %v20, %v22
  %s24 = scalar_lea.vmem %s0, 48
  %v25 = vld [vmem:[%s24] sm:$0xff]
  %v26 = vadd.f32 %v23, %v25
  %s27 = scalar_lea.vmem %s0, 56
  %v28 = vld [vmem:[%s27] sm:$0xff]
  %v29 = vadd.f32 %v26, %v28
  %v30 = vmul.f32 %v29, 0.125
  %vm31 = vcmask 23552
  %32 = vst.msk [vmem:[%s1] sm:$0xff] %vm31, %v30
  // Predicated region
  $region6: #{tpu_custom_call.1} parent=0 // pred_check
    _
  $region7: #{tpu_custom_call.1} parent=0 // pred_check_branch
    %34 = sbr.rel (0) target = $region9
  $region8: #{tpu_custom_call.1} parent=0 // pred_region
    _
  $region9: #{tpu_custom_call.1} parent=0 // pred_fallthru
    _
  // Predicated region
  $region10: #{tpu_custom_call.1} parent=0 // pred_check
    _
  $region11: #{tpu_custom_call.1} parent=0 // pred_check_branch
    %36 = sbr.rel (0) target = $region13
  $region12: #{tpu_custom_call.1} parent=0 // pred_region
    _
  $region13: #{tpu_custom_call.1} parent=0 // pred_fallthru
    _

</llo_original>
